<compile_context>
chip_gen: v6e
topology: v6e:2x2x1
jax: 0.10.0
libtpu: 0.0.40
codegen_flags: <defaults>
</compile_context>

<pallas_src>
import functools

import jax
import jax.numpy as jnp
from jax.experimental import pallas as pl
from jax.experimental.pallas import tpu as pltpu


# ----------------------------------------------------------------------------
# Reference quantize / dequantize (pure JAX, mirrors the torch module exactly)
# ----------------------------------------------------------------------------
def block_quantize_4bit(x, group_size=16):
    assert x.ndim == 1 and x.shape[0] % group_size == 0
    x = x.reshape(-1, group_size)
    # NOTE: an all-zero group gives normalization == 0 -> NaN (same as the torch code).
    normalization = jnp.max(jnp.abs(x), axis=-1, keepdims=True)
    x_norm = (x + normalization) / (2.0 * normalization)
    x_quant_8 = jnp.round(x_norm * 15.0).astype(jnp.int8)
    x_quant_4 = (x_quant_8[:, ::2] & 15) + ((x_quant_8[:, 1::2] & 15) << 4)
    return x_quant_4.astype(jnp.int8), normalization.astype(jnp.float16)


def block_dequantize_4bit(x_quant_4, normalization):
    normalization = normalization.astype(jnp.float32)
    q = x_quant_4.astype(jnp.int32)
    low = (q & 15).astype(jnp.float32)
    high = ((q >> 4) & 15).astype(jnp.float32)
    x_quant_8 = jnp.stack([low, high], axis=-1).reshape(q.shape[0], -1)
    x_norm = x_quant_8 / 15.0
    x = x_norm * 2.0 * normalization - normalization
    return x.reshape(-1)


# ----------------------------------------------------------------------------
# One-time ("load-time") repack of the module buffers into a kernel-friendly layout.
# Pure layout / bit work; no dequantization arithmetic happens here.
# ----------------------------------------------------------------------------
def prepare_linear4bit_weights(weight_q4, weight_norm, out_features, in_features,
                               group_size=16):
    O, K, gs = out_features, in_features, group_size
    assert K % (2 * gs) == 0, "in_features must be a multiple of 2*group_size"
    K2 = K // 2
    assert weight_q4.shape == (O * K // gs, gs // 2)

    # PyTorch layout: byte (o, c) packs weight columns (o, 2c) [low] / (o, 2c+1) [high].
    wq2d = weight_q4.reshape(O, K2).astype(jnp.int32)
    q_even = wq2d & 15            # columns 0, 2, 4, ...
    q_odd = (wq2d >> 4) & 15      # columns 1, 3, 5, ...
    q_full = jnp.stack([q_even, q_odd], axis=-1).reshape(O, K)   # 4-bit codes, 0..15

    # Split-half repack: byte (o, c) now packs column c (low) and column c + K/2 (high),
    # so the matching activation halves are contiguous column ranges of x.
    packed = (q_full[:, :K2] + (q_full[:, K2:] << 4)).astype(jnp.uint8)
    wq_t = packed.T                                              # (K2, O) -- MXU-natural

    # Per-group scale s = 2*norm/15 (zero-point factoring: w = q*s - norm) and the norm
    # itself, both transposed to (K/gs, O).  Kept f32 in HBM (tiny arrays, accurate
    # master copy); the kernel casts s to bf16, norm feeds the f32 correction term.
    norm_t = weight_norm.astype(jnp.float32).reshape(O, K // gs).T
    scale_t = norm_t * (2.0 / 15.0)
    return wq_t, scale_t, norm_t


# ----------------------------------------------------------------------------
# Pallas kernel: nibble unpack + bf16 per-group scale + bf16 MXU matmul (f32 acc)
# ----------------------------------------------------------------------------
def _linear4bit_kernel(x_lo_ref, x_hi_ref, wq_ref, s_lo_ref, s_hi_ref, add_ref,
                       o_ref, *, group_size):
    k = pl.program_id(2)

    @pl.when(k == 0)
    def _init():
        o_ref[...] = jnp.zeros_like(o_ref)

    # Nibble unpack (VPU int ops).  Bytes are zero-extended (0..255), so the high
    # nibble needs no '& 15'.  Codes 0..15 are exact in bf16; the i32->f32->bf16
    # two-step cast is the portable lowering path.
    wq = wq_ref[...].astype(jnp.int32)
    q_lo = (wq & 15).astype(jnp.float32).astype(jnp.bfloat16)
    q_hi = (wq >> 4).astype(jnp.float32).astype(jnp.bfloat16)

    # Zero-point factored dequant: w = q * s.  The '- norm' term is linear in x and is
    # folded into add_ref (= bias - xg @ norm), added on the last k step.  Per-group
    # scales (gk, tn) are expanded to (tk, tn) with a sublane repeat; all elementwise
    # math stays flat 2D bf16 (half the VALU work of the old f32 path).
    s_lo = jnp.repeat(s_lo_ref[...].astype(jnp.bfloat16), group_size, axis=0)
    s_hi = jnp.repeat(s_hi_ref[...].astype(jnp.bfloat16), group_size, axis=0)
    w_lo = q_lo * s_lo
    w_hi = q_hi * s_hi

    o_ref[...] += (jnp.dot(x_lo_ref[...], w_lo, preferred_element_type=jnp.float32)
                   + jnp.dot(x_hi_ref[...], w_hi, preferred_element_type=jnp.float32))

    @pl.when(k == pl.num_programs(2) - 1)
    def _finalize():
        o_ref[...] += add_ref[...]


def linear4bit_forward(x, wq_t, scale_t, norm_t, bias, out_features, in_features,
                       *, group_size=16, tm=512, tn=256, tk=512):
    """x: (B, in_features); wq_t: (K/2, O) uint8 (split-half packed, transposed);
    scale_t / norm_t: (K/gs, O) f32; bias: (O,) f32 or None.  Returns (B, O) f32."""
    B = x.shape[0]
    O, K, gs = out_features, in_features, group_size
    K2 = K // 2
    assert x.shape == (B, K) and wq_t.shape == (K2, O)
    assert scale_t.shape == (K // gs, O) and norm_t.shape == (K // gs, O)

    # ---- tile selection ------------------------------------------------------
    # Big tm amortizes weight DMA + dequant for prefill (MXU-bound); decode uses tm=B.
    tm = min(tm, B)
    tn = min(tn, O)
    tk = min(tk, K2)
    tk = max((tk // gs) * gs, gs)                 # keep weight tiles group-aligned
    # v7x has 2 TensorCores sharded over the "parallel" grid axes: keep >= 2 tiles.
    while (B // tm) * (O // tn) < 2 and tn >= 256:
        tn //= 2
    assert B % tm == 0, "batch must be divisible by the chosen tm tile"
    assert O % tn == 0, "out_features must be divisible by the chosen tn tile"
    assert K2 % tk == 0 and tk % gs == 0, "in_features/2 must be divisible by tk"
    assert tk % 128 == 0, ("tk must be a multiple of 128 lanes so every block is "
                           "lane-aligned (use in_features that is a multiple of 256)")
    gk = tk // gs
    kh = K2 // tk                                 # block offset of the high half
    grid = (B // tm, O // tn, K2 // tk)

    if bias is None:
        bias = jnp.zeros((O,), jnp.float32)

    # Zero-point correction folded with the bias into one (B, O) addend:
    #   out = x @ (q*s).T - xg @ norm + bias,   xg[b, g] = sum of x over group g.
    # xg + the small (depth K/gs) correction matmul run once in XLA at f32.
    x_f32 = x.astype(jnp.float32)
    xg = x_f32.reshape(B, K // gs, gs).sum(axis=-1)
    addend = bias.astype(jnp.float32)[None, :] - jnp.dot(
        xg, norm_t, preferred_element_type=jnp.float32)

    # bf16 activations: halves x DMA bytes (critical on v5e); the kernel fed bf16 to
    # the MXU anyway.  Passed twice with index maps that differ by a constant block
    # offset, so no host-side x[:, :K2] / x[:, K2:] slice copies are materialized.
    x_bf16 = x.astype(jnp.bfloat16)

    kernel = functools.partial(_linear4bit_kernel, group_size=gs)

    flops = 2 * B * K * O
    bytes_accessed = (B * K * 2 * (O // tn) + K2 * O * (B // tm)
                      + 2 * (K // gs) * O * 4 * (B // tm) + 2 * B * O * 4)

    return pl.pallas_call(
        kernel,
        out_shape=jax.ShapeDtypeStruct((B, O), jnp.float32),
        grid_spec=pltpu.PrefetchScalarGridSpec(
            num_scalar_prefetch=0,
            grid=grid,
            in_specs=[
                pl.BlockSpec((tm, tk), lambda i, j, k: (i, k)),        # x, low half
                pl.BlockSpec((tm, tk), lambda i, j, k: (i, k + kh)),   # x, high half
                pl.BlockSpec((tk, tn), lambda i, j, k: (k, j)),        # packed weights
                pl.BlockSpec((gk, tn), lambda i, j, k: (k, j)),        # scales, low
                pl.BlockSpec((gk, tn), lambda i, j, k: (k + kh, j)),   # scales, high
                pl.BlockSpec((tm, tn), lambda i, j, k: (i, j)),        # bias - correction
            ],
            out_specs=pl.BlockSpec((tm, tn), lambda i, j, k: (i, j)),
        ),
        compiler_params=pltpu.CompilerParams(
            dimension_semantics=("parallel", "parallel", "arbitrary"),
            vmem_limit_bytes=48 * 1024 * 1024,     # below v7x's 64 MiB physical VMEM
        ),
        cost_estimate=pl.CostEstimate(
            flops=flops, transcendentals=0, bytes_accessed=bytes_accessed),
    )(x_bf16, x_bf16, wq_t, scale_t, scale_t, addend)


# ----------------------------------------------------------------------------
if __name__ == "__main__":
    # Smallest shapes that exercise the full tiled/pipelined path while keeping every
    # BlockSpec lane/sublane aligned: K/2 and O multiples of 128, two k steps, and a
    # (1, 2) parallel grid so a v7x dual-TensorCore chip has work for both cores.
    B, IN, OUT, GS = 8, 512, 256, 16

    key = jax.random.PRNGKey(0)
    kx, kw, kb = jax.random.split(key, 3)
    x = jax.random.normal(kx, (B, IN), dtype=jnp.float32)
    weight_fp = jax.random.normal(kw, (OUT, IN), dtype=jnp.float32)
    bias = jax.random.normal(kb, (OUT,), dtype=jnp.float32)

    # Mimic the module's state-dict pre-hook: quantize the full-precision weight ...
    weight_q4, weight_norm = block_quantize_4bit(weight_fp.reshape(-1), group_size=GS)
    # ... then repack once (load time) into the kernel-friendly layout.
    wq_t, scale_t, norm_t = prepare_linear4bit_weights(
        weight_q4, weight_norm, OUT, IN, group_size=GS)

    out = linear4bit_forward(x, wq_t, scale_t, norm_t, bias, OUT, IN,
                             group_size=GS, tk=128)
    out = jax.block_until_ready(out)

    # Pure-JAX reference: dequantize exactly as the torch module, then f32 matmul.
    w_deq = block_dequantize_4bit(weight_q4, weight_norm).reshape(OUT, IN)
    ref = jnp.dot(x, w_deq.T, precision=jax.lax.Precision.HIGHEST) + bias[None, :]

    assert out.shape == (B, OUT) and out.dtype == jnp.float32
    abs_err = float(jnp.max(jnp.abs(out - ref)))
    rel_err = float(jnp.linalg.norm(out - ref) / jnp.linalg.norm(ref))
    # bf16 MXU operands + bf16 dequant add ~1e-1-scale absolute noise at K=512, far
    # below the module's own 4-bit quantization error vs. the fp32 weights.
    assert rel_err < 2e-2, f"relative error too large: {rel_err}"
    assert jnp.allclose(out, ref, rtol=5e-2, atol=7.5e-1), (
        f"max abs err = {abs_err}, rel err = {rel_err}")

    print("KERNEL_OK")
</pallas_src>

<mosaic_0001>
module attributes {stable_mosaic.version = 11 : i64} {
  func.func @_linear4bit_kernel(%arg0: i32, %arg1: i32, %arg2: i32, %arg3: memref<8x128xbf16, #tpu.memory_space<vmem>>, %arg4: memref<8x128xbf16, #tpu.memory_space<vmem>>, %arg5: memref<128x128xi8, #tpu.memory_space<vmem>>, %arg6: memref<8x128xf32, #tpu.memory_space<vmem>>, %arg7: memref<8x128xf32, #tpu.memory_space<vmem>>, %arg8: memref<8x128xf32, #tpu.memory_space<vmem>>, %arg9: memref<8x128xf32, #tpu.memory_space<vmem>>) attributes {dimension_semantics = [#tpu.dimension_semantics<parallel>, #tpu.dimension_semantics<parallel>, #tpu.dimension_semantics<arbitrary>], iteration_bounds = array<i64: 1, 2, 2>, scalar_prefetch = 0 : i64, scratch_operands = 0 : i64, tpu.core_type = #tpu.core_type<tc>, window_params = [{transform_indices = @transform_0, window_bounds = array<i64: 8, 128>}, {transform_indices = @transform_1, window_bounds = array<i64: 8, 128>}, {transform_indices = @transform_2, window_bounds = array<i64: 128, 128>}, {transform_indices = @transform_3, window_bounds = array<i64: 8, 128>}, {transform_indices = @transform_4, window_bounds = array<i64: 8, 128>}, {transform_indices = @transform_5, window_bounds = array<i64: 8, 128>}, {transform_indices = @transform_6, window_bounds = array<i64: 8, 128>}]} {
    %c0_i32 = arith.constant 0 : i32
    %0 = arith.cmpi eq, %arg2, %c0_i32 : i32
    %1 = arith.extui %0 : i1 to i32
    %c0_i32_0 = arith.constant 0 : i32
    %2 = arith.cmpi ne, %1, %c0_i32_0 : i32
    scf.if %2 {
      %cst_16 = arith.constant 0.000000e+00 : f32
      %36 = vector.broadcast %cst_16 : f32 to vector<8x128xf32>
      %c0_17 = arith.constant 0 : index
      %c0_18 = arith.constant 0 : index
      %37 = vector.load %arg9[%c0_17, %c0_18] : memref<8x128xf32, #tpu.memory_space<vmem>>, vector<8x128xf32>
      tpu.vector_store %arg9[%c0_17, %c0_18], %36 {strides = array<i32>} : memref<8x128xf32, #tpu.memory_space<vmem>>, vector<8x128xf32>,
    } else {
    }
    %c0 = arith.constant 0 : index
    %c0_1 = arith.constant 0 : index
    %3 = vector.load %arg5[%c0, %c0_1] : memref<128x128xi8, #tpu.memory_space<vmem>>, vector<128x128xi8>
    %4 = arith.extui %3 : vector<128x128xi8> to vector<128x128xi32>
    %c15_i32 = arith.constant 15 : i32
    %5 = vector.broadcast %c15_i32 : i32 to vector<128x128xi32>
    %6 = arith.andi %4, %5 : vector<128x128xi32>
    %7 = arith.sitofp %6 : vector<128x128xi32> to vector<128x128xf32>
    %8 = arith.truncf %7 : vector<128x128xf32> to vector<128x128xbf16>
    %c4_i32 = arith.constant 4 : i32
    %9 = vector.broadcast %c4_i32 : i32 to vector<128x128xi32>
    %10 = arith.shrsi %4, %9 : vector<128x128xi32>
    %11 = arith.sitofp %10 : vector<128x128xi32> to vector<128x128xf32>
    %12 = arith.truncf %11 : vector<128x128xf32> to vector<128x128xbf16>
    %c0_2 = arith.constant 0 : index
    %c0_3 = arith.constant 0 : index
    %13 = vector.load %arg6[%c0_2, %c0_3] : memref<8x128xf32, #tpu.memory_space<vmem>>, vector<8x128xf32>
    %14 = arith.truncf %13 : vector<8x128xf32> to vector<8x128xbf16>
    %15 = vector.shape_cast %14 : vector<8x128xbf16> to vector<8x1x128xbf16>
    %16 = vector.broadcast %15 : vector<8x1x128xbf16> to vector<8x16x128xbf16>
    %17 = vector.shape_cast %16 : vector<8x16x128xbf16> to vector<128x128xbf16>
    %c0_4 = arith.constant 0 : index
    %c0_5 = arith.constant 0 : index
    %18 = vector.load %arg7[%c0_4, %c0_5] : memref<8x128xf32, #tpu.memory_space<vmem>>, vector<8x128xf32>
    %19 = arith.truncf %18 : vector<8x128xf32> to vector<8x128xbf16>
    %20 = vector.shape_cast %19 : vector<8x128xbf16> to vector<8x1x128xbf16>
    %21 = vector.broadcast %20 : vector<8x1x128xbf16> to vector<8x16x128xbf16>
    %22 = vector.shape_cast %21 : vector<8x16x128xbf16> to vector<128x128xbf16>
    %23 = arith.mulf %8, %17 : vector<128x128xbf16>
    %24 = arith.mulf %12, %22 : vector<128x128xbf16>
    %c0_6 = arith.constant 0 : index
    %c0_7 = arith.constant 0 : index
    %25 = vector.load %arg9[%c0_6, %c0_7] : memref<8x128xf32, #tpu.memory_space<vmem>>, vector<8x128xf32>
    %c0_8 = arith.constant 0 : index
    %c0_9 = arith.constant 0 : index
    %26 = vector.load %arg3[%c0_8, %c0_9] : memref<8x128xbf16, #tpu.memory_space<vmem>>, vector<8x128xbf16>
    %cst = arith.constant dense<0.000000e+00> : vector<8x128xf32>
    %27 = tpu.matmul %26, %23, %cst {dimension_numbers = #tpu.dot_dimension_numbers<[1], [0], [0], [1], [0, 0, 1, 1], [], []>} : vector<8x128xbf16>, vector<128x128xbf16>, vector<8x128xf32> -> vector<8x128xf32>
    %c0_10 = arith.constant 0 : index
    %c0_11 = arith.constant 0 : index
    %28 = vector.load %arg4[%c0_10, %c0_11] : memref<8x128xbf16, #tpu.memory_space<vmem>>, vector<8x128xbf16>
    %cst_12 = arith.constant dense<0.000000e+00> : vector<8x128xf32>
    %29 = tpu.matmul %28, %24, %cst_12 {dimension_numbers = #tpu.dot_dimension_numbers<[1], [0], [0], [1], [0, 0, 1, 1], [], []>} : vector<8x128xbf16>, vector<128x128xbf16>, vector<8x128xf32> -> vector<8x128xf32>
    %30 = arith.addf %27, %29 : vector<8x128xf32>
    %31 = arith.addf %25, %30 : vector<8x128xf32>
    %c0_13 = arith.constant 0 : index
    %c0_14 = arith.constant 0 : index
    %32 = vector.load %arg9[%c0_13, %c0_14] : memref<8x128xf32, #tpu.memory_space<vmem>>, vector<8x128xf32>
    tpu.vector_store %arg9[%c0_13, %c0_14], %31 {strides = array<i32>} : memref<8x128xf32, #tpu.memory_space<vmem>>, vector<8x128xf32>,
    %c1_i32 = arith.constant 1 : i32
    %33 = arith.cmpi eq, %arg2, %c1_i32 : i32
    %34 = arith.extui %33 : i1 to i32
    %c0_i32_15 = arith.constant 0 : i32
    %35 = arith.cmpi ne, %34, %c0_i32_15 : i32
    scf.if %35 {
      %c0_16 = arith.constant 0 : index
      %c0_17 = arith.constant 0 : index
      %36 = vector.load %arg9[%c0_16, %c0_17] : memref<8x128xf32, #tpu.memory_space<vmem>>, vector<8x128xf32>
      %c0_18 = arith.constant 0 : index
      %c0_19 = arith.constant 0 : index
      %37 = vector.load %arg8[%c0_18, %c0_19] : memref<8x128xf32, #tpu.memory_space<vmem>>, vector<8x128xf32>
      %38 = arith.addf %36, %37 : vector<8x128xf32>
      %c0_20 = arith.constant 0 : index
      %c0_21 = arith.constant 0 : index
      %39 = vector.load %arg9[%c0_20, %c0_21] : memref<8x128xf32, #tpu.memory_space<vmem>>, vector<8x128xf32>
      tpu.vector_store %arg9[%c0_20, %c0_21], %38 {strides = array<i32>} : memref<8x128xf32, #tpu.memory_space<vmem>>, vector<8x128xf32>,
    } else {
    }
    return
  }
  func.func @transform_0(%arg0: i32, %arg1: i32, %arg2: i32) -> (i32, i32) {
    %c0_i32 = arith.constant 0 : i32
    return %arg0, %arg2 : i32, i32
  }
  func.func @transform_1(%arg0: i32, %arg1: i32, %arg2: i32) -> (i32, i32) {
    %c2_i32 = arith.constant 2 : i32
    %0 = arith.addi %arg2, %c2_i32 : i32
    %c0_i32 = arith.constant 0 : i32
    return %arg0, %0 : i32, i32
  }
  func.func @transform_2(%arg0: i32, %arg1: i32, %arg2: i32) -> (i32, i32) {
    %c0_i32 = arith.constant 0 : i32
    return %arg2, %arg1 : i32, i32
  }
  func.func @transform_3(%arg0: i32, %arg1: i32, %arg2: i32) -> (i32, i32) {
    %c0_i32 = arith.constant 0 : i32
    return %arg2, %arg1 : i32, i32
  }
  func.func @transform_4(%arg0: i32, %arg1: i32, %arg2: i32) -> (i32, i32) {
    %c2_i32 = arith.constant 2 : i32
    %0 = arith.addi %arg2, %c2_i32 : i32
    %c0_i32 = arith.constant 0 : i32
    return %0, %arg1 : i32, i32
  }
  func.func @transform_5(%arg0: i32, %arg1: i32, %arg2: i32) -> (i32, i32) {
    %c0_i32 = arith.constant 0 : i32
    return %arg0, %arg1 : i32, i32
  }
  func.func @transform_6(%arg0: i32, %arg1: i32, %arg2: i32) -> (i32, i32) {
    %c0_i32 = arith.constant 0 : i32
    return %arg0, %arg1 : i32, i32
  }
}

</mosaic_0001>

<llo_original>
// kernel: tpu_custom_call.1
$region0: #{tpu_custom_call.1}
  #allocation0 [shape = 'u32[]', space=smem, size = 0x4, offset = 0x4, fixed_abs, tag = 'smem constant byte address 0x4 - core index']
  #allocation1 [shape = 'u32[144,128]{1,0:T(1,128)}', space=vmem, size = 0x12000, scoped, tag = 'internal scratch']
  %s0 = inlined_call_operand.hbm [shape: bf16[8,512], index: 0, kind: input, shape index: {}]
  %s1 = inlined_call_operand.hbm [shape: bf16[8,512], index: 1, kind: input, shape index: {}]
  %s2 = inlined_call_operand.hbm [shape: u8[256,256], index: 2, kind: input, shape index: {}]
  %s3 = inlined_call_operand.hbm [shape: f32[32,256], index: 3, kind: input, shape index: {}]
  %s4 = inlined_call_operand.hbm [shape: f32[32,256], index: 4, kind: input, shape index: {}]
  %s5 = inlined_call_operand.hbm [shape: f32[8,256], index: 5, kind: input, shape index: {}]
  %s6 = inlined_call_operand.hbm [shape: f32[8,256], index: 6, kind: output, shape index: {}]
  %s7 = sld [smem:[#allocation0]]
  $region89: #{tpu_custom_call.1} parent=0
    _
  %s9 = ssub.s32 1, %s7
  %s10 = scalar_select 0, %s9, %s7
  $region1: #{tpu_custom_call.1} parent=0
    #allocation2 [shape = 'u8[4096]{0}', space=vmem, size = 0x1000, scoped, tag = 'input window, operand 0']
    #allocation3 [shape = 's32[2]{0}', space=sflag, size = 0x8, scoped, tag = 'scoped memory for tpu_custom_call.1']
    #allocation4 [shape = 's32[2]{0}', space=sflag, size = 0x8, scoped, tag = 'scoped memory for tpu_custom_call.1']
    #allocation5 [shape = 'u8[4096]{0}', space=vmem, size = 0x1000, scoped, tag = 'input window, operand 1']
    #allocation6 [shape = 's32[2]{0}', space=sflag, size = 0x8, scoped, tag = 'scoped memory for tpu_custom_call.1']
    #allocation7 [shape = 'u8[32768]{0}', space=vmem, size = 0x8000, scoped, tag = 'input window, operand 2']
    #allocation8 [shape = 'u8[8192]{0}', space=vmem, size = 0x2000, scoped, tag = 'input window, operand 3']
    #allocation9 [shape = 's32[2]{0}', space=sflag, size = 0x8, scoped, tag = 'scoped memory for tpu_custom_call.1']
    #allocation10 [shape = 'u8[8192]{0}', space=vmem, size = 0x2000, scoped, tag = 'input window, operand 4']
    #allocation11 [shape = 'u8[8192]{0}', space=vmem, size = 0x2000, scoped, tag = 'input window, operand 5']
    #allocation12 [shape = 's32[2]{0}', space=sflag, size = 0x8, scoped, tag = 'scoped memory for tpu_custom_call.1']
    #allocation13 [shape = 'u8[8192]{0}', space=vmem, size = 0x2000, scoped, tag = 'output window, operand 0']
    %11 = vsyncpa [#allocation3], 0
    %s12 = scalar_lea.sflag [#allocation3], 1
    %13 = vsyncpa %s12, 0
    %14 = vsyncpa [#allocation6], 0
    %s15 = scalar_lea.sflag [#allocation6], 1
    %16 = vsyncpa %s15, 0
    %17 = vsyncpa [#allocation9], 0
    %s18 = scalar_lea.sflag [#allocation9], 1
    %19 = vsyncpa %s18, 0
    %20 = vsyncpa [#allocation12], 0
    %s21 = scalar_lea.sflag [#allocation12], 1
    %22 = vsyncpa %s21, 0
    %23 = vsyncpa [#allocation4], 0
    %s24 = scalar_lea.sflag [#allocation4], 1
    %25 = vsyncpa %s24, 0
    loop: start=0, step=1, limit=6
    $region2: #{tpu_custom_call.1} parent=1 // loop_pre_header
      _
    $region3: #{tpu_custom_call.1} parent=1 // loop_header
      %s27 = sphi 0, %s31
      %p28 = scmp.ge.s32.totalorder %s27, 6
      %s34 = sphi 0, %s53
      %s35 = sphi 0, %s49
      %s36 = sphi 0, %s45
      %s37 = sphi 0, %s34
      %s38 = sphi 0, %s35
      %s39 = sphi 0, %s36
      %s40 = sphi 0, %s37
      %s41 = sphi 0, %s38
      %s42 = sphi 0, %s39
      %s58 = sphi 0, %s60
      %s61 = sphi 0, %s58
      %s62 = sphi 0, %s61
      %s78 = sphi 0, %s62
      %s88 = sphi 0, %s90
      %s91 = sphi 0, %s88
      %s92 = sphi 0, %s91
      %s108 = sphi 0, %s92
      %s116 = sphi 0, %s118
      %s119 = sphi 0, %s116
      %s120 = sphi 0, %s119
      %s136 = sphi 0, %s120
      %s144 = sphi 0, %s146
      %s147 = sphi 0, %s144
      %s148 = sphi 0, %s147
      %s164 = sphi 0, %s148
      %s174 = sphi 0, %s176
      %s177 = sphi 0, %s174
      %s178 = sphi 0, %s177
      %s194 = sphi 0, %s178
      %s202 = sphi 0, %s204
      %s205 = sphi 0, %s202
      %s206 = sphi 0, %s205
      %s222 = sphi 0, %s206
      %s230 = sphi 0, %s232
      %s233 = sphi 0, %s230
      %s234 = sphi 0, %s233
      %s250 = sphi 0, %s234
    $region4: #{tpu_custom_call.1} parent=1 // loop_header_branch
      %30 = sbr.rel (%p28) target = $region8
    $region5: #{tpu_custom_call.1} parent=1 // loop_body
      %s32 = ssub.s32 %s27, 1
      %s33 = ssub.s32 %s27, 2
      %s43 = sadd.s32 1, %s36
      %p44 = scmp.ge.s32.totalorder %s43, 2
      %s45 = scalar_select %p44, 0, %s43
      %s46 = sadd.s32 1, %s35
      %s47 = scalar_select %p44, %s46, %s35
      %p48 = scmp.ge.s32.totalorder %s47, 2
      %s49 = scalar_select %p48, 0, %s47
      %s50 = sadd.s32 1, %s34
      %s51 = scalar_select %p48, %s50, %s34
      %p52 = scmp.ge.s32.totalorder %s51, 1
      %s53 = scalar_select %p52, 0, %s51
      %s54 = ssub.s32 %s34, %s53
      %s55 = ssub.s32 %s36, %s45
      %s56 = sor.u32 %s54, %s55
      %p57 = scmp.eq.s32.totalorder %s56, 0
      %s59 = sadd.s32 %s58, 1
      %s60 = scalar_select %p57, %s58, %s59
      %p63 = pneg %p57
      %p64 = scmp.eq.s32.totalorder %s27, 3
      %p65 = por %p63, %p64
      %p66 = scmp.ne.s32.totalorder %s58, %s61
      %p67 = scmp.eq.s32.totalorder %s27, 0
      %p68 = por %p66, %p67
      %p69 = scmp.ne.s32.totalorder %s58, %s61
      %p70 = scmp.eq.s32.totalorder %s32, 3
      %p71 = por %p69, %p70
      %p72 = scmp.ne.s32.totalorder %s61, %s62
      %p73 = scmp.eq.s32.totalorder %s32, 0
      %p74 = por %p72, %p73
      %p75 = scmp.ne.s32.totalorder %s61, %s62
      %p76 = scmp.eq.s32.totalorder %s33, 3
      %p77 = por %p75, %p76
      %p79 = scmp.ne.s32.totalorder %s62, %s78
      %p80 = scmp.eq.s32.totalorder %s33, 0
      %p81 = por %p79, %p80
      %s82 = sadd.s32 %s36, 2
      %s83 = sadd.s32 %s45, 2
      %s84 = ssub.s32 %s34, %s53
      %s85 = ssub.s32 %s82, %s83
      %s86 = sor.u32 %s84, %s85
      %p87 = scmp.eq.s32.totalorder %s86, 0
      %s89 = sadd.s32 %s88, 1
      %s90 = scalar_select %p87, %s88, %s89
      %p93 = pneg %p87
      %p94 = scmp.eq.s32.totalorder %s27, 3
      %p95 = por %p93, %p94
      %p96 = scmp.ne.s32.totalorder %s88, %s91
      %p97 = scmp.eq.s32.totalorder %s27, 0
      %p98 = por %p96, %p97
      %p99 = scmp.ne.s32.totalorder %s88, %s91
      %p100 = scmp.eq.s32.totalorder %s32, 3
      %p101 = por %p99, %p100
      %p102 = scmp.ne.s32.totalorder %s91, %s92
      %p103 = scmp.eq.s32.totalorder %s32, 0
      %p104 = por %p102, %p103
      %p105 = scmp.ne.s32.totalorder %s91, %s92
      %p106 = scmp.eq.s32.totalorder %s33, 3
      %p107 = por %p105, %p106
      %p109 = scmp.ne.s32.totalorder %s92, %s108
      %p110 = scmp.eq.s32.totalorder %s33, 0
      %p111 = por %p109, %p110
      %s112 = ssub.s32 %s36, %s45
      %s113 = ssub.s32 %s35, %s49
      %s114 = sor.u32 %s112, %s113
      %p115 = scmp.eq.s32.totalorder %s114, 0
      %s117 = sadd.s32 %s116, 1
      %s118 = scalar_select %p115, %s116, %s117
      %p121 = pneg %p115
      %p122 = scmp.eq.s32.totalorder %s27, 3
      %p123 = por %p121, %p122
      %p124 = scmp.ne.s32.totalorder %s116, %s119
      %p125 = scmp.eq.s32.totalorder %s27, 0
      %p126 = por %p124, %p125
      %p127 = scmp.ne.s32.totalorder %s116, %s119
      %p128 = scmp.eq.s32.totalorder %s32, 3
      %p129 = por %p127, %p128
      %p130 = scmp.ne.s32.totalorder %s119, %s120
      %p131 = scmp.eq.s32.totalorder %s32, 0
      %p132 = por %p130, %p131
      %p133 = scmp.ne.s32.totalorder %s119, %s120
      %p134 = scmp.eq.s32.totalorder %s33, 3
      %p135 = por %p133, %p134
      %p137 = scmp.ne.s32.totalorder %s120, %s136
      %p138 = scmp.eq.s32.totalorder %s33, 0
      %p139 = por %p137, %p138
      %s140 = ssub.s32 %s36, %s45
      %s141 = ssub.s32 %s35, %s49
      %s142 = sor.u32 %s140, %s141
      %p143 = scmp.eq.s32.totalorder %s142, 0
      %s145 = sadd.s32 %s144, 1
      %s146 = scalar_select %p143, %s144, %s145
      %p149 = pneg %p143
      %p150 = scmp.eq.s32.totalorder %s27, 3
      %p151 = por %p149, %p150
      %p152 = scmp.ne.s32.totalorder %s144, %s147
      %p153 = scmp.eq.s32.totalorder %s27, 0
      %p154 = por %p152, %p153
      %p155 = scmp.ne.s32.totalorder %s144, %s147
      %p156 = scmp.eq.s32.totalorder %s32, 3
      %p157 = por %p155, %p156
      %p158 = scmp.ne.s32.totalorder %s147, %s148
      %p159 = scmp.eq.s32.totalorder %s32, 0
      %p160 = por %p158, %p159
      %p161 = scmp.ne.s32.totalorder %s147, %s148
      %p162 = scmp.eq.s32.totalorder %s33, 3
      %p163 = por %p161, %p162
      %p165 = scmp.ne.s32.totalorder %s148, %s164
      %p166 = scmp.eq.s32.totalorder %s33, 0
      %p167 = por %p165, %p166
      %s168 = sadd.s32 %s36, 2
      %s169 = sadd.s32 %s45, 2
      %s170 = ssub.s32 %s168, %s169
      %s171 = ssub.s32 %s35, %s49
      %s172 = sor.u32 %s170, %s171
      %p173 = scmp.eq.s32.totalorder %s172, 0
      %s175 = sadd.s32 %s174, 1
      %s176 = scalar_select %p173, %s174, %s175
      %p179 = pneg %p173
      %p180 = scmp.eq.s32.totalorder %s27, 3
      %p181 = por %p179, %p180
      %p182 = scmp.ne.s32.totalorder %s174, %s177
      %p183 = scmp.eq.s32.totalorder %s27, 0
      %p184 = por %p182, %p183
      %p185 = scmp.ne.s32.totalorder %s174, %s177
      %p186 = scmp.eq.s32.totalorder %s32, 3
      %p187 = por %p185, %p186
      %p188 = scmp.ne.s32.totalorder %s177, %s178
      %p189 = scmp.eq.s32.totalorder %s32, 0
      %p190 = por %p188, %p189
      %p191 = scmp.ne.s32.totalorder %s177, %s178
      %p192 = scmp.eq.s32.totalorder %s33, 3
      %p193 = por %p191, %p192
      %p195 = scmp.ne.s32.totalorder %s178, %s194
      %p196 = scmp.eq.s32.totalorder %s33, 0
      %p197 = por %p195, %p196
      %s198 = ssub.s32 %s34, %s53
      %s199 = ssub.s32 %s35, %s49
      %s200 = sor.u32 %s198, %s199
      %p201 = scmp.eq.s32.totalorder %s200, 0
      %s203 = sadd.s32 %s202, 1
      %s204 = scalar_select %p201, %s202, %s203
      %p207 = pneg %p201
      %p208 = scmp.eq.s32.totalorder %s27, 3
      %p209 = por %p207, %p208
      %p210 = scmp.ne.s32.totalorder %s202, %s205
      %p211 = scmp.eq.s32.totalorder %s27, 0
      %p212 = por %p210, %p211
      %p213 = scmp.ne.s32.totalorder %s202, %s205
      %p214 = scmp.eq.s32.totalorder %s32, 3
      %p215 = por %p213, %p214
      %p216 = scmp.ne.s32.totalorder %s205, %s206
      %p217 = scmp.eq.s32.totalorder %s32, 0
      %p218 = por %p216, %p217
      %p219 = scmp.ne.s32.totalorder %s205, %s206
      %p220 = scmp.eq.s32.totalorder %s33, 3
      %p221 = por %p219, %p220
      %p223 = scmp.ne.s32.totalorder %s206, %s222
      %p224 = scmp.eq.s32.totalorder %s33, 0
      %p225 = por %p223, %p224
      %s226 = ssub.s32 %s34, %s53
      %s227 = ssub.s32 %s35, %s49
      %s228 = sor.u32 %s226, %s227
      %p229 = scmp.eq.s32.totalorder %s228, 0
      %s231 = sadd.s32 %s230, 1
      %s232 = scalar_select %p229, %s230, %s231
      %p235 = pneg %p229
      %p236 = scmp.eq.s32.totalorder %s27, 3
      %p237 = por %p235, %p236
      %p238 = scmp.ne.s32.totalorder %s230, %s233
      %p239 = scmp.eq.s32.totalorder %s27, 0
      %p240 = por %p238, %p239
      %p241 = scmp.ne.s32.totalorder %s230, %s233
      %p242 = scmp.eq.s32.totalorder %s32, 3
      %p243 = por %p241, %p242
      %p244 = scmp.ne.s32.totalorder %s233, %s234
      %p245 = scmp.eq.s32.totalorder %s32, 0
      %p246 = por %p244, %p245
      %p247 = scmp.ne.s32.totalorder %s233, %s234
      %p248 = scmp.eq.s32.totalorder %s33, 3
      %p249 = por %p247, %p248
      %p251 = scmp.ne.s32.totalorder %s234, %s250
      %p252 = scmp.eq.s32.totalorder %s33, 0
      %p253 = por %p251, %p252
      %p254 = scmp.le.s32.totalorder 1, %s27
      %p255 = scmp.lt.s32.totalorder %s27, 5
      %p256 = pnand %p254, %p255
      %p257 = pneg %p256
      // Predicated region
      $region9: #{tpu_custom_call.1} parent=5 // pred_check
        _
      $region10: #{tpu_custom_call.1} parent=5 // pred_check_branch
        %259 = sbr.rel (%p256) target = $region12
      $region11: #{tpu_custom_call.1} parent=5 // pred_region
        %s260 = ssub.s32 %s27, 1
      $region12: #{tpu_custom_call.1} parent=5 // pred_fallthru
        _
      %p261 = scmp.lt.s32.totalorder %s27, 4
      // Predicated region
      $region13: #{tpu_custom_call.1} parent=5 // pred_check
        %p262 = pneg %p261
      $region14: #{tpu_custom_call.1} parent=5 // pred_check_branch
        %264 = sbr.rel (%p262) target = $region16
      $region15: #{tpu_custom_call.1} parent=5 // pred_region
        // Predicated region
        $region17: #{tpu_custom_call.1} parent=15 // pred_check
          %p265 = pneg %p68
        $region18: #{tpu_custom_call.1} parent=15 // pred_check_branch
          %267 = sbr.rel (%p265) target = $region20
        $region19: #{tpu_custom_call.1} parent=15 // pred_region
          %s268 = sand.u32 %s58, 1
          %s269 = scalar_lea.sflag [#allocation3], %s268
          %s270 = sand.u32 %s58, 1
          %s271 = smul.addr %s270, 4
          %s272 = scalar_lea.vmem [#allocation2], %s271
          %s274 = ssub.s32 64, 64
          %275 = vsyncadd %s269, %s274
          %s276 = smul.addr %s34, 4
          %s277 = sadd.s32 %s36, %s276
          %s278 = smul.addr %s277, 64
          %s279 = scalar_lea.hbm %s0, %s278
          %s281 = sshll.u32 %s272, 4
          %s282 = int_to_ptr.vmem [resolvable:$true] %s281
          %284 = dma.hbm_to_vmem [thread:$0]  %s279, 64, %s282, %s269
        $region20: #{tpu_custom_call.1} parent=15 // pred_fallthru
          _
        // Predicated region
        $region21: #{tpu_custom_call.1} parent=15 // pred_check
          %p285 = pneg %p98
        $region22: #{tpu_custom_call.1} parent=15 // pred_check_branch
          %287 = sbr.rel (%p285) target = $region24
        $region23: #{tpu_custom_call.1} parent=15 // pred_region
          %s288 = sand.u32 %s27, 1
          %s289 = scalar_lea.sflag [#allocation6], %s288
          %s290 = sand.u32 %s88, 1
          %s291 = smul.addr %s290, 4
          %s292 = scalar_lea.vmem [#allocation5], %s291
          %s293 = sadd.s32 %s36, 2
          %s295 = ssub.s32 64, 64
          %296 = vsyncadd %s289, %s295
          %s297 = smul.addr %s34, 4
          %s298 = sadd.s32 %s293, %s297
          %s299 = smul.addr %s298, 64
          %s300 = scalar_lea.hbm %s1, %s299
          %s302 = sshll.u32 %s292, 4
          %s303 = int_to_ptr.vmem [resolvable:$true] %s302
          %305 = dma.hbm_to_vmem [thread:$0]  %s300, 64, %s303, %s289
        $region24: #{tpu_custom_call.1} parent=15 // pred_fallthru
          _
        // Predicated region
        $region25: #{tpu_custom_call.1} parent=15 // pred_check
          %p306 = pneg %p126
        $region26: #{tpu_custom_call.1} parent=15 // pred_check_branch
          %308 = sbr.rel (%p306) target = $region28
        $region27: #{tpu_custom_call.1} parent=15 // pred_region
          %s309 = sand.u32 %s27, 1
          %s310 = scalar_lea.sflag [#allocation6], %s309
          %s311 = sand.u32 %s116, 1
          %s312 = smul.addr %s311, 32
          %s313 = scalar_lea.vmem [#allocation7], %s312
          %s314 = smul.u32 4, %s36
          %s316 = ssub.s32 512, 512
          %317 = vsyncadd %s310, %s316
          %s318 = smul.addr %s314, 2
          %s319 = sadd.s32 %s35, %s318
          %s320 = smul.addr %s319, 128
          %s321 = scalar_lea.hbm %s2, %s320
          %s322 = sshll.u32 %s313, 4
          %s323 = int_to_ptr.vmem [resolvable:$true] %s322
          %328 = dma.hbm_to_vmem [thread:$0]  %s321, 512, %s323, %s310, 256, 128, 8
        $region28: #{tpu_custom_call.1} parent=15 // pred_fallthru
          _
        // Predicated region
        $region29: #{tpu_custom_call.1} parent=15 // pred_check
          %p329 = pneg %p154
        $region30: #{tpu_custom_call.1} parent=15 // pred_check_branch
          %331 = sbr.rel (%p329) target = $region32
        $region31: #{tpu_custom_call.1} parent=15 // pred_region
          %s332 = sand.u32 %s27, 1
          %s333 = scalar_lea.sflag [#allocation9], %s332
          %s334 = sand.u32 %s144, 1
          %s335 = smul.addr %s334, 8
          %s336 = scalar_lea.vmem [#allocation8], %s335
          %s338 = ssub.s32 128, 128
          %339 = vsyncadd %s333, %s338
          %s340 = smul.addr %s36, 2
          %s341 = sadd.s32 %s35, %s340
          %s342 = smul.addr %s341, 128
          %s343 = scalar_lea.hbm %s3, %s342
          %s345 = sshll.u32 %s336, 4
          %s346 = int_to_ptr.vmem [resolvable:$true] %s345
          %348 = dma.hbm_to_vmem [thread:$0]  %s343, 128, %s346, %s333
        $region32: #{tpu_custom_call.1} parent=15 // pred_fallthru
          _
        // Predicated region
        $region33: #{tpu_custom_call.1} parent=15 // pred_check
          %p349 = pneg %p184
        $region34: #{tpu_custom_call.1} parent=15 // pred_check_branch
          %351 = sbr.rel (%p349) target = $region36
        $region35: #{tpu_custom_call.1} parent=15 // pred_region
          %s352 = sand.u32 %s27, 1
          %s353 = scalar_lea.sflag [#allocation9], %s352
          %s354 = sand.u32 %s174, 1
          %s355 = smul.addr %s354, 8
          %s356 = scalar_lea.vmem [#allocation10], %s355
          %s357 = sadd.s32 %s36, 2
          %s359 = ssub.s32 128, 128
          %360 = vsyncadd %s353, %s359
          %s361 = smul.addr %s357, 2
          %s362 = sadd.s32 %s35, %s361
          %s363 = smul.addr %s362, 128
          %s364 = scalar_lea.hbm %s4, %s363
          %s366 = sshll.u32 %s356, 4
          %s367 = int_to_ptr.vmem [resolvable:$true] %s366
          %369 = dma.hbm_to_vmem [thread:$0]  %s364, 128, %s367, %s353
        $region36: #{tpu_custom_call.1} parent=15 // pred_fallthru
          _
        // Predicated region
        $region37: #{tpu_custom_call.1} parent=15 // pred_check
          %p370 = pneg %p212
        $region38: #{tpu_custom_call.1} parent=15 // pred_check_branch
          %372 = sbr.rel (%p370) target = $region40
        $region39: #{tpu_custom_call.1} parent=15 // pred_region
          %s373 = sand.u32 %s202, 1
          %s374 = scalar_lea.sflag [#allocation12], %s373
          %s375 = sand.u32 %s202, 1
          %s376 = smul.addr %s375, 8
          %s377 = scalar_lea.vmem [#allocation11], %s376
          %s379 = ssub.s32 128, 128
          %380 = vsyncadd %s374, %s379
          %s381 = smul.addr %s34, 2
          %s382 = sadd.s32 %s35, %s381
          %s383 = smul.addr %s382, 128
          %s384 = scalar_lea.hbm %s5, %s383
          %s386 = sshll.u32 %s377, 4
          %s387 = int_to_ptr.vmem [resolvable:$true] %s386
          %389 = dma.hbm_to_vmem [thread:$0]  %s384, 128, %s387, %s374
        $region40: #{tpu_custom_call.1} parent=15 // pred_fallthru
          _
      $region16: #{tpu_custom_call.1} parent=5 // pred_fallthru
        _
      %p390 = scmp.le.s32.totalorder 1, %s27
      %p391 = scmp.lt.s32.totalorder %s27, 5
      %p392 = pnand %p390, %p391
      %p393 = pneg %p392
      // Predicated region
      $region41: #{tpu_custom_call.1} parent=5 // pred_check
        _
      $region42: #{tpu_custom_call.1} parent=5 // pred_check_branch
        %395 = sbr.rel (%p392) target = $region44
      $region43: #{tpu_custom_call.1} parent=5 // pred_region
        %s396 = ssub.s32 %s27, 1
        %s397 = sand.u32 %s61, 1
        %s398 = scalar_lea.sflag [#allocation3], %s397
        %s399 = sand.u32 %s61, 1
        %s400 = smul.addr %s399, 4
        %s401 = scalar_lea.vmem [#allocation2], %s400
        // Predicated region
        $region45: #{tpu_custom_call.1} parent=43 // pred_check
          %p402 = pneg %p74
        $region46: #{tpu_custom_call.1} parent=43 // pred_check_branch
          %404 = sbr.rel (%p402) target = $region48
        $region47: #{tpu_custom_call.1} parent=43 // pred_region
          %405 = dma.done %s398, 64
        $region48: #{tpu_custom_call.1} parent=43 // pred_fallthru
          _
        %s406 = sand.u32 %s32, 1
        %s407 = scalar_lea.sflag [#allocation6], %s406
        %s408 = sand.u32 %s91, 1
        %s409 = smul.addr %s408, 4
        %s410 = scalar_lea.vmem [#allocation5], %s409
        // Predicated region
        $region49: #{tpu_custom_call.1} parent=43 // pred_check
          %p411 = pneg %p104
        $region50: #{tpu_custom_call.1} parent=43 // pred_check_branch
          %413 = sbr.rel (%p411) target = $region52
        $region51: #{tpu_custom_call.1} parent=43 // pred_region
          %414 = dma.done %s407, 64
        $region52: #{tpu_custom_call.1} parent=43 // pred_fallthru
          _
        %s415 = sand.u32 %s32, 1
        %s416 = scalar_lea.sflag [#allocation6], %s415
        %s417 = sand.u32 %s119, 1
        %s418 = smul.addr %s417, 32
        %s419 = scalar_lea.vmem [#allocation7], %s418
        // Predicated region
        $region53: #{tpu_custom_call.1} parent=43 // pred_check
          %p420 = pneg %p132
        $region54: #{tpu_custom_call.1} parent=43 // pred_check_branch
          %422 = sbr.rel (%p420) target = $region56
        $region55: #{tpu_custom_call.1} parent=43 // pred_region
          %423 = dma.done %s416, 512
        $region56: #{tpu_custom_call.1} parent=43 // pred_fallthru
          _
        %s424 = sand.u32 %s32, 1
        %s425 = scalar_lea.sflag [#allocation9], %s424
        %s426 = sand.u32 %s147, 1
        %s427 = smul.addr %s426, 8
        %s428 = scalar_lea.vmem [#allocation8], %s427
        // Predicated region
        $region57: #{tpu_custom_call.1} parent=43 // pred_check
          %p429 = pneg %p160
        $region58: #{tpu_custom_call.1} parent=43 // pred_check_branch
          %431 = sbr.rel (%p429) target = $region60
        $region59: #{tpu_custom_call.1} parent=43 // pred_region
          %432 = dma.done %s425, 128
        $region60: #{tpu_custom_call.1} parent=43 // pred_fallthru
          _
        %s433 = sand.u32 %s32, 1
        %s434 = scalar_lea.sflag [#allocation9], %s433
        %s435 = sand.u32 %s177, 1
        %s436 = smul.addr %s435, 8
        %s437 = scalar_lea.vmem [#allocation10], %s436
        // Predicated region
        $region61: #{tpu_custom_call.1} parent=43 // pred_check
          %p438 = pneg %p190
        $region62: #{tpu_custom_call.1} parent=43 // pred_check_branch
          %440 = sbr.rel (%p438) target = $region64
        $region63: #{tpu_custom_call.1} parent=43 // pred_region
          %441 = dma.done %s434, 128
        $region64: #{tpu_custom_call.1} parent=43 // pred_fallthru
          _
        %s442 = sand.u32 %s205, 1
        %s443 = scalar_lea.sflag [#allocation12], %s442
        %s444 = sand.u32 %s205, 1
        %s445 = smul.addr %s444, 8
        %s446 = scalar_lea.vmem [#allocation11], %s445
        // Predicated region
        $region65: #{tpu_custom_call.1} parent=43 // pred_check
          %p447 = pneg %p218
        $region66: #{tpu_custom_call.1} parent=43 // pred_check_branch
          %449 = sbr.rel (%p447) target = $region68
        $region67: #{tpu_custom_call.1} parent=43 // pred_region
          %450 = dma.done %s443, 128
        $region68: #{tpu_custom_call.1} parent=43 // pred_fallthru
          _
        %s451 = sand.u32 %s61, 1
        %s452 = scalar_lea.sflag [#allocation3], %s451
        %s453 = sand.u32 %s61, 1
        %s454 = smul.addr %s453, 4
        %s455 = scalar_lea.vmem [#allocation2], %s454
        %p456 = pneg %p74
        %p457 = pneg %p71
        %s458 = sand.u32 %s32, 1
        %s459 = scalar_lea.sflag [#allocation6], %s458
        %s460 = sand.u32 %s91, 1
        %s461 = smul.addr %s460, 4
        %s462 = scalar_lea.vmem [#allocation5], %s461
        %p463 = pneg %p104
        %p464 = pneg %p101
        %s465 = sand.u32 %s32, 1
        %s466 = scalar_lea.sflag [#allocation6], %s465
        %s467 = sand.u32 %s119, 1
        %s468 = smul.addr %s467, 32
        %s469 = scalar_lea.vmem [#allocation7], %s468
        %p470 = pneg %p132
        %p471 = pneg %p129
        %s472 = sand.u32 %s32, 1
        %s473 = scalar_lea.sflag [#allocation9], %s472
        %s474 = sand.u32 %s147, 1
        %s475 = smul.addr %s474, 8
        %s476 = scalar_lea.vmem [#allocation8], %s475
        %p477 = pneg %p160
        %p478 = pneg %p157
        %s479 = sand.u32 %s32, 1
        %s480 = scalar_lea.sflag [#allocation9], %s479
        %s481 = sand.u32 %s177, 1
        %s482 = smul.addr %s481, 8
        %s483 = scalar_lea.vmem [#allocation10], %s482
        %p484 = pneg %p190
        %p485 = pneg %p187
        %s486 = sand.u32 %s205, 1
        %s487 = scalar_lea.sflag [#allocation12], %s486
        %s488 = sand.u32 %s205, 1
        %s489 = smul.addr %s488, 8
        %s490 = scalar_lea.vmem [#allocation11], %s489
        %p491 = pneg %p218
        %p492 = pneg %p215
        %p493 = pneg %p246
        %p494 = pneg %p243
        %s495 = sand.u32 %s233, 1
        %s496 = scalar_lea.sflag [#allocation4], %s495
        %s497 = sand.u32 %s233, 1
        %s498 = smul.addr %s497, 8
        %s499 = scalar_lea.vmem [#allocation13], %s498
        %s500 = sadd.s32 %s39, 2
        %s501 = smul.u32 4, %s39
        %s502 = sadd.s32 %s39, 2
        %p504 = scmp.eq.s32.totalorder %s39, 0
        // Predicated region
        $region69: #{tpu_custom_call.1} parent=43 // pred_check
          %p505 = pneg %p504
        $region70: #{tpu_custom_call.1} parent=43 // pred_check_branch
          %507 = sbr.rel (%p505) target = $region72
        $region71: #{tpu_custom_call.1} parent=43 // pred_region
          %508 = vst [vmem:[%s499] sm:$0xff] 0.0
        $region72: #{tpu_custom_call.1} parent=43 // pred_fallthru
          _
        %v509 = vld [vmem:[%s419] sm:$0xff]
        %v510 = vld [vmem:[%s419 + $0x8] sm:$0xff]
        %v511 = vld [vmem:[%s419 + $0x10] sm:$0xff]
        %v512 = vld [vmem:[%s419 + $0x18] sm:$0xff]
        %v513 = vunpack.c.0.s8 %v509
        %v514 = vunpack.c.1.s8 %v509
        %v515 = vunpack.c.2.s8 %v509
        %v516 = vunpack.c.3.s8 %v509
        %v517 = vunpack.c.0.s8 %v510
        %v518 = vunpack.c.1.s8 %v510
        %v519 = vunpack.c.2.s8 %v510
        %v520 = vunpack.c.3.s8 %v510
        %v521 = vunpack.c.0.s8 %v511
        %v522 = vunpack.c.1.s8 %v511
        %v523 = vunpack.c.2.s8 %v511
        %v524 = vunpack.c.3.s8 %v511
        %v525 = vunpack.c.0.s8 %v512
        %v526 = vunpack.c.1.s8 %v512
        %v527 = vunpack.c.2.s8 %v512
        %v528 = vunpack.c.3.s8 %v512
        %v529 = vand.u32 %v513, 255
        %v530 = vand.u32 %v514, 255
        %v531 = vand.u32 %v515, 255
        %v532 = vand.u32 %v516, 255
        %v533 = vand.u32 %v517, 255
        %v534 = vand.u32 %v518, 255
        %v535 = vand.u32 %v519, 255
        %v536 = vand.u32 %v520, 255
        %v537 = vand.u32 %v521, 255
        %v538 = vand.u32 %v522, 255
        %v539 = vand.u32 %v523, 255
        %v540 = vand.u32 %v524, 255
        %v541 = vand.u32 %v525, 255
        %v542 = vand.u32 %v526, 255
        %v543 = vand.u32 %v527, 255
        %v544 = vand.u32 %v528, 255
        %v545 = vand.u32 %v529, 15
        %v546 = vand.u32 %v530, 15
        %v547 = vand.u32 %v531, 15
        %v548 = vand.u32 %v532, 15
        %v549 = vand.u32 %v533, 15
        %v550 = vand.u32 %v534, 15
        %v551 = vand.u32 %v535, 15
        %v552 = vand.u32 %v536, 15
        %v553 = vand.u32 %v537, 15
        %v554 = vand.u32 %v538, 15
        %v555 = vand.u32 %v539, 15
        %v556 = vand.u32 %v540, 15
        %v557 = vand.u32 %v541, 15
        %v558 = vand.u32 %v542, 15
        %v559 = vand.u32 %v543, 15
        %v560 = vand.u32 %v544, 15
        %v561 = vcvt.s32.f32 %v545
        %v562 = vcvt.s32.f32 %v546
        %v563 = vcvt.s32.f32 %v547
        %v564 = vcvt.s32.f32 %v548
        %v565 = vcvt.s32.f32 %v549
        %v566 = vcvt.s32.f32 %v550
        %v567 = vcvt.s32.f32 %v551
        %v568 = vcvt.s32.f32 %v552
        %v569 = vcvt.s32.f32 %v553
        %v570 = vcvt.s32.f32 %v554
        %v571 = vcvt.s32.f32 %v555
        %v572 = vcvt.s32.f32 %v556
        %v573 = vcvt.s32.f32 %v557
        %v574 = vcvt.s32.f32 %v558
        %v575 = vcvt.s32.f32 %v559
        %v576 = vcvt.s32.f32 %v560
        %v577 = vpack.c.bf16 %v562, %v561
        %v578 = vpack.c.bf16 %v564, %v563
        %v579 = vpack.c.bf16 %v566, %v565
        %v580 = vpack.c.bf16 %v568, %v567
        %v581 = vpack.c.bf16 %v570, %v569
        %v582 = vpack.c.bf16 %v572, %v571
        %v583 = vpack.c.bf16 %v574, %v573
        %v584 = vpack.c.bf16 %v576, %v575
        %v585 = vshra.s32 %v529, 4
        %v586 = vshra.s32 %v530, 4
        %v587 = vshra.s32 %v531, 4
        %v588 = vshra.s32 %v532, 4
        %v589 = vshra.s32 %v533, 4
        %v590 = vshra.s32 %v534, 4
        %v591 = vshra.s32 %v535, 4
        %v592 = vshra.s32 %v536, 4
        %v593 = vshra.s32 %v537, 4
        %v594 = vshra.s32 %v538, 4
        %v595 = vshra.s32 %v539, 4
        %v596 = vshra.s32 %v540, 4
        %v597 = vshra.s32 %v541, 4
        %v598 = vshra.s32 %v542, 4
        %v599 = vshra.s32 %v543, 4
        %v600 = vshra.s32 %v544, 4
        %v601 = vcvt.s32.f32 %v585
        %v602 = vcvt.s32.f32 %v586
        %v603 = vcvt.s32.f32 %v587
        %v604 = vcvt.s32.f32 %v588
        %v605 = vcvt.s32.f32 %v589
        %v606 = vcvt.s32.f32 %v590
        %v607 = vcvt.s32.f32 %v591
        %v608 = vcvt.s32.f32 %v592
        %v609 = vcvt.s32.f32 %v593
        %v610 = vcvt.s32.f32 %v594
        %v611 = vcvt.s32.f32 %v595
        %v612 = vcvt.s32.f32 %v596
        %v613 = vcvt.s32.f32 %v597
        %v614 = vcvt.s32.f32 %v598
        %v615 = vcvt.s32.f32 %v599
        %v616 = vcvt.s32.f32 %v600
        %v617 = vpack.c.bf16 %v602, %v601
        %v618 = vpack.c.bf16 %v604, %v603
        %v619 = vpack.c.bf16 %v606, %v605
        %v620 = vpack.c.bf16 %v608, %v607
        %v621 = vpack.c.bf16 %v610, %v609
        %v622 = vpack.c.bf16 %v612, %v611
        %v623 = vpack.c.bf16 %v614, %v613
        %v624 = vpack.c.bf16 %v616, %v615
        %v625 = vld [vmem:[%s428] sm:$0xff]
        %v626 = vpack.c.bf16 %v625, %v625
        %v629 = vunpack.c.l.s4 1966171168
        %v630 = vunpack.c.0.s8 %v629
        %v631 = vlaneseq
        %v632 = vshrl.u32 %v631, 7
        %v633 = vsub.s32 %v630, %v632
        %v634 = vrot.slane %v626, %v633
        %v635 = vcombine.high %v634, %v634
        %v637 = vunpack.c.l.s4 1966171168
        %v638 = vunpack.c.0.s8 %v637
        %v639 = vlaneseq
        %v640 = vshrl.u32 %v639, 7
        %v641 = vsub.s32 %v638, %v640
        %v642 = vrot.slane %v634, %v641
        %v644 = vunpack.c.l.s4 1966171168
        %v645 = vunpack.c.0.s8 %v644
        %v646 = vlaneseq
        %v647 = vshrl.u32 %v646, 7
        %v648 = vsub.s32 %v645, %v647
        %v649 = vrot.slane %v635, %v648
        %v650 = vcombine.high %v642, %v642
        %v651 = vcombine.high %v649, %v649
        %v652 = vunpack.i.l.s16 %v642
        %v653 = vunpack.i.h.s16 %v642
        %v654 = vunpack.i.l.s16 %v649
        %v655 = vunpack.i.h.s16 %v649
        %v656 = vunpack.i.l.s16 %v650
        %v657 = vunpack.i.h.s16 %v650
        %v658 = vunpack.i.l.s16 %v651
        %v659 = vunpack.i.h.s16 %v651
        %v660 = vpack.i.b16 %v652, %v652
        %v661 = vpack.i.b16 %v653, %v653
        %v662 = vpack.i.b16 %v654, %v654
        %v663 = vpack.i.b16 %v655, %v655
        %v664 = vpack.i.b16 %v656, %v656
        %v665 = vpack.i.b16 %v657, %v657
        %v666 = vpack.i.b16 %v658, %v658
        %v667 = vpack.i.b16 %v659, %v659
        %v668 = vlaneseq
        %v669 = vshrl.u32 %v668, 7
        %v670 = vsub.s32 0, %v669
        %v671 = vrot.slane %v660, %v670
        %v672 = vlaneseq
        %v673 = vshrl.u32 %v672, 7
        %v674 = vsub.s32 0, %v673
        %v675 = vrot.slane %v661, %v674
        %v676 = vlaneseq
        %v677 = vshrl.u32 %v676, 7
        %v678 = vsub.s32 0, %v677
        %v679 = vrot.slane %v662, %v678
        %v680 = vlaneseq
        %v681 = vshrl.u32 %v680, 7
        %v682 = vsub.s32 0, %v681
        %v683 = vrot.slane %v663, %v682
        %v684 = vlaneseq
        %v685 = vshrl.u32 %v684, 7
        %v686 = vsub.s32 0, %v685
        %v687 = vrot.slane %v664, %v686
        %v688 = vlaneseq
        %v689 = vshrl.u32 %v688, 7
        %v690 = vsub.s32 0, %v689
        %v691 = vrot.slane %v665, %v690
        %v692 = vlaneseq
        %v693 = vshrl.u32 %v692, 7
        %v694 = vsub.s32 0, %v693
        %v695 = vrot.slane %v666, %v694
        %v696 = vlaneseq
        %v697 = vshrl.u32 %v696, 7
        %v698 = vsub.s32 0, %v697
        %v699 = vrot.slane %v667, %v698
        %v701 = vpack.i.b16 %v671, %v671
        %v703 = vlaneseq
        %v704 = vshrl.u32 %v703, 7
        %v705 = vsub.s32 0, %v704
        %v706 = vrot.slane %v701, %v705
        %v708 = vpack.i.b16 %v675, %v675
        %v710 = vlaneseq
        %v711 = vshrl.u32 %v710, 7
        %v712 = vsub.s32 0, %v711
        %v713 = vrot.slane %v708, %v712
        %v715 = vpack.i.b16 %v679, %v679
        %v717 = vlaneseq
        %v718 = vshrl.u32 %v717, 7
        %v719 = vsub.s32 0, %v718
        %v720 = vrot.slane %v715, %v719
        %v722 = vpack.i.b16 %v683, %v683
        %v724 = vlaneseq
        %v725 = vshrl.u32 %v724, 7
        %v726 = vsub.s32 0, %v725
        %v727 = vrot.slane %v722, %v726
        %v729 = vpack.i.b16 %v687, %v687
        %v731 = vlaneseq
        %v732 = vshrl.u32 %v731, 7
        %v733 = vsub.s32 0, %v732
        %v734 = vrot.slane %v729, %v733
        %v736 = vpack.i.b16 %v691, %v691
        %v738 = vlaneseq
        %v739 = vshrl.u32 %v738, 7
        %v740 = vsub.s32 0, %v739
        %v741 = vrot.slane %v736, %v740
        %v743 = vpack.i.b16 %v695, %v695
        %v745 = vlaneseq
        %v746 = vshrl.u32 %v745, 7
        %v747 = vsub.s32 0, %v746
        %v748 = vrot.slane %v743, %v747
        %v750 = vpack.i.b16 %v699, %v699
        %v752 = vlaneseq
        %v753 = vshrl.u32 %v752, 7
        %v754 = vsub.s32 0, %v753
        %v755 = vrot.slane %v750, %v754
        %v756 = vld [vmem:[%s437] sm:$0xff]
        %v757 = vpack.c.bf16 %v756, %v756
        %v760 = vunpack.c.l.s4 1966171168
        %v761 = vunpack.c.0.s8 %v760
        %v762 = vlaneseq
        %v763 = vshrl.u32 %v762, 7
        %v764 = vsub.s32 %v761, %v763
        %v765 = vrot.slane %v757, %v764
        %v766 = vcombine.high %v765, %v765
        %v768 = vunpack.c.l.s4 1966171168
        %v769 = vunpack.c.0.s8 %v768
        %v770 = vlaneseq
        %v771 = vshrl.u32 %v770, 7
        %v772 = vsub.s32 %v769, %v771
        %v773 = vrot.slane %v765, %v772
        %v775 = vunpack.c.l.s4 1966171168
        %v776 = vunpack.c.0.s8 %v775
        %v777 = vlaneseq
        %v778 = vshrl.u32 %v777, 7
        %v779 = vsub.s32 %v776, %v778
        %v780 = vrot.slane %v766, %v779
        %v781 = vcombine.high %v773, %v773
        %v782 = vcombine.high %v780, %v780
        %v783 = vunpack.i.l.s16 %v773
        %v784 = vunpack.i.h.s16 %v773
        %v785 = vunpack.i.l.s16 %v780
        %v786 = vunpack.i.h.s16 %v780
        %v787 = vunpack.i.l.s16 %v781
        %v788 = vunpack.i.h.s16 %v781
        %v789 = vunpack.i.l.s16 %v782
        %v790 = vunpack.i.h.s16 %v782
        %v791 = vpack.i.b16 %v783, %v783
        %v792 = vpack.i.b16 %v784, %v784
        %v793 = vpack.i.b16 %v785, %v785
        %v794 = vpack.i.b16 %v786, %v786
        %v795 = vpack.i.b16 %v787, %v787
        %v796 = vpack.i.b16 %v788, %v788
        %v797 = vpack.i.b16 %v789, %v789
        %v798 = vpack.i.b16 %v790, %v790
        %v799 = vlaneseq
        %v800 = vshrl.u32 %v799, 7
        %v801 = vsub.s32 0, %v800
        %v802 = vrot.slane %v791, %v801
        %v803 = vlaneseq
        %v804 = vshrl.u32 %v803, 7
        %v805 = vsub.s32 0, %v804
        %v806 = vrot.slane %v792, %v805
        %v807 = vlaneseq
        %v808 = vshrl.u32 %v807, 7
        %v809 = vsub.s32 0, %v808
        %v810 = vrot.slane %v793, %v809
        %v811 = vlaneseq
        %v812 = vshrl.u32 %v811, 7
        %v813 = vsub.s32 0, %v812
        %v814 = vrot.slane %v794, %v813
        %v815 = vlaneseq
        %v816 = vshrl.u32 %v815, 7
        %v817 = vsub.s32 0, %v816
        %v818 = vrot.slane %v795, %v817
        %v819 = vlaneseq
        %v820 = vshrl.u32 %v819, 7
        %v821 = vsub.s32 0, %v820
        %v822 = vrot.slane %v796, %v821
        %v823 = vlaneseq
        %v824 = vshrl.u32 %v823, 7
        %v825 = vsub.s32 0, %v824
        %v826 = vrot.slane %v797, %v825
        %v827 = vlaneseq
        %v828 = vshrl.u32 %v827, 7
        %v829 = vsub.s32 0, %v828
        %v830 = vrot.slane %v798, %v829
        %v832 = vpack.i.b16 %v802, %v802
        %v834 = vlaneseq
        %v835 = vshrl.u32 %v834, 7
        %v836 = vsub.s32 0, %v835
        %v837 = vrot.slane %v832, %v836
        %v839 = vpack.i.b16 %v806, %v806
        %v841 = vlaneseq
        %v842 = vshrl.u32 %v841, 7
        %v843 = vsub.s32 0, %v842
        %v844 = vrot.slane %v839, %v843
        %v846 = vpack.i.b16 %v810, %v810
        %v848 = vlaneseq
        %v849 = vshrl.u32 %v848, 7
        %v850 = vsub.s32 0, %v849
        %v851 = vrot.slane %v846, %v850
        %v853 = vpack.i.b16 %v814, %v814
        %v855 = vlaneseq
        %v856 = vshrl.u32 %v855, 7
        %v857 = vsub.s32 0, %v856
        %v858 = vrot.slane %v853, %v857
        %v860 = vpack.i.b16 %v818, %v818
        %v862 = vlaneseq
        %v863 = vshrl.u32 %v862, 7
        %v864 = vsub.s32 0, %v863
        %v865 = vrot.slane %v860, %v864
        %v867 = vpack.i.b16 %v822, %v822
        %v869 = vlaneseq
        %v870 = vshrl.u32 %v869, 7
        %v871 = vsub.s32 0, %v870
        %v872 = vrot.slane %v867, %v871
        %v874 = vpack.i.b16 %v826, %v826
        %v876 = vlaneseq
        %v877 = vshrl.u32 %v876, 7
        %v878 = vsub.s32 0, %v877
        %v879 = vrot.slane %v874, %v878
        %v881 = vpack.i.b16 %v830, %v830
        %v883 = vlaneseq
        %v884 = vshrl.u32 %v883, 7
        %v885 = vsub.s32 0, %v884
        %v886 = vrot.slane %v881, %v885
        %v887 = vmul.bf16 %v577, %v706
        %v888 = vmul.bf16 %v578, %v713
        %v889 = vmul.bf16 %v579, %v720
        %v890 = vmul.bf16 %v580, %v727
        %v891 = vmul.bf16 %v581, %v734
        %v892 = vmul.bf16 %v582, %v741
        %v893 = vmul.bf16 %v583, %v748
        %v894 = vmul.bf16 %v584, %v755
        %v895 = vmul.bf16 %v617, %v837
        %v896 = vmul.bf16 %v618, %v844
        %v897 = vmul.bf16 %v619, %v851
        %v898 = vmul.bf16 %v620, %v858
        %v899 = vmul.bf16 %v621, %v865
        %v900 = vmul.bf16 %v622, %v872
        %v901 = vmul.bf16 %v623, %v879
        %v902 = vmul.bf16 %v624, %v886
        %v903 = vld [vmem:[%s499] sm:$0xff]
        %v904 = vld [vmem:[%s401] sm:$0xf]
        %v905 = vld [vmem:[%s410] sm:$0xf]
        %906 = vmatprep.subr.bf16.mxu0 0
        %907 = vmatpush1.bf16.msra.mxu0 %v902
        %908 = vmatprep.subr.bf16.mxu0 0
        %909 = vmatpush1.bf16.msra.mxu0 %v901
        %910 = vmatprep.subr.bf16.mxu0 0
        %911 = vmatpush1.bf16.msra.mxu0 %v900
        %912 = vmatprep.subr.bf16.mxu0 0
        %913 = vmatpush1.bf16.msra.mxu0 %v899
        %914 = vmatprep.subr.bf16.mxu0 0
        %915 = vmatpush1.bf16.msra.mxu0 %v898
        %916 = vmatprep.subr.bf16.mxu0 0
        %917 = vmatpush1.bf16.msra.mxu0 %v897
        %918 = vmatprep.subr.bf16.mxu0 0
        %919 = vmatpush1.bf16.msra.mxu0 %v896
        %920 = vmatprep.subr.bf16.mxu0 0
        %921 = vmatpush1.bf16.msra.mxu0 %v895
        %922 = vmatprep.subr.bf16.mxu0 0
        %923 = vmatpush2.bf16.msra.mxu0 0
        %924 = vmatprep.subr.bf16.mxu0 0
        %925 = vmatpush2.bf16.msra.mxu0 0
        %926 = vmatprep.subr.bf16.mxu0 0
        %927 = vmatpush2.bf16.msra.mxu0 0
        %928 = vmatprep.subr.bf16.mxu0 0
        %929 = vmatpush2.bf16.msra.mxu0 0
        %930 = vmatprep.subr.bf16.mxu0 0
        %931 = vmatpush2.bf16.msra.mxu0 0
        %932 = vmatprep.subr.bf16.mxu0 0
        %933 = vmatpush2.bf16.msra.mxu0 0
        %934 = vmatprep.subr.bf16.mxu0 0
        %935 = vmatpush2.bf16.msra.mxu0 0
        %936 = vmatprep.subr.bf16.mxu0 0
        %937 = vmatpush2.bf16.msra.mxu0 0
        %938 = vmatprep.mubr.bf16.mxu0 0
        %939 = vmatmul.mubr.bf16.gmra.mxu0 %v905
        %v940 = vpop.f32.mrf.mxu0
        %v941 = vadd.f32 0.0, %v940
        %v942 = vpop.f32.mrf.mxu0
        %v943 = vpop.f32.mrf.mxu0
        %v944 = vpop.f32.mrf.mxu0
        %945 = vdwg.mxu0
        %946 = vmatprep.subr.bf16.mxu0 0
        %947 = vmatpush1.bf16.msra.mxu0 %v894
        %948 = vmatprep.subr.bf16.mxu0 0
        %949 = vmatpush1.bf16.msra.mxu0 %v893
        %950 = vmatprep.subr.bf16.mxu0 0
        %951 = vmatpush1.bf16.msra.mxu0 %v892
        %952 = vmatprep.subr.bf16.mxu0 0
        %953 = vmatpush1.bf16.msra.mxu0 %v891
        %954 = vmatprep.subr.bf16.mxu0 0
        %955 = vmatpush1.bf16.msra.mxu0 %v890
        %956 = vmatprep.subr.bf16.mxu0 0
        %957 = vmatpush1.bf16.msra.mxu0 %v889
        %958 = vmatprep.subr.bf16.mxu0 0
        %959 = vmatpush1.bf16.msra.mxu0 %v888
        %960 = vmatprep.subr.bf16.mxu0 0
        %961 = vmatpush1.bf16.msra.mxu0 %v887
        %962 = vmatprep.subr.bf16.mxu0 0
        %963 = vmatpush2.bf16.msra.mxu0 0
        %964 = vmatprep.subr.bf16.mxu0 0
        %965 = vmatpush2.bf16.msra.mxu0 0
        %966 = vmatprep.subr.bf16.mxu0 0
        %967 = vmatpush2.bf16.msra.mxu0 0
        %968 = vmatprep.subr.bf16.mxu0 0
        %969 = vmatpush2.bf16.msra.mxu0 0
        %970 = vmatprep.subr.bf16.mxu0 0
        %971 = vmatpush2.bf16.msra.mxu0 0
        %972 = vmatprep.subr.bf16.mxu0 0
        %973 = vmatpush2.bf16.msra.mxu0 0
        %974 = vmatprep.subr.bf16.mxu0 0
        %975 = vmatpush2.bf16.msra.mxu0 0
        %976 = vmatprep.subr.bf16.mxu0 0
        %977 = vmatpush2.bf16.msra.mxu0 0
        %978 = vmatprep.mubr.bf16.mxu0 0
        %979 = vmatmul.mubr.bf16.gmra.mxu0 %v904
        %v980 = vpop.f32.mrf.mxu0
        %v981 = vadd.f32 %v941, %v980
        %v982 = vpop.f32.mrf.mxu0
        %v983 = vpop.f32.mrf.mxu0
        %v984 = vpop.f32.mrf.mxu0
        %985 = vdwg.mxu0
        %v986 = vadd.f32 %v903, %v981
        %987 = vst [vmem:[%s499] sm:$0xff] %v986
        %p988 = scmp.eq.s32.totalorder %s39, 1
        // Predicated region
        $region73: #{tpu_custom_call.1} parent=43 // pred_check
          %p989 = pneg %p988
        $region74: #{tpu_custom_call.1} parent=43 // pred_check_branch
          %991 = sbr.rel (%p989) target = $region76
        $region75: #{tpu_custom_call.1} parent=43 // pred_region
          %v992 = vld [vmem:[%s499] sm:$0xff]
          %v993 = vld [vmem:[%s446] sm:$0xff]
          %v994 = vadd.f32 %v992, %v993
          %995 = vst [vmem:[%s499] sm:$0xff] %v994
        $region76: #{tpu_custom_call.1} parent=43 // pred_fallthru
          _
        %s996 = sand.u32 %s233, 1
        %s997 = scalar_lea.sflag [#allocation4], %s996
        %s998 = sand.u32 %s233, 1
        %s999 = smul.addr %s998, 8
        %s1000 = scalar_lea.vmem [#allocation13], %s999
        // Predicated region
        $region77: #{tpu_custom_call.1} parent=43 // pred_check
          %p1001 = pneg %p243
        $region78: #{tpu_custom_call.1} parent=43 // pred_check_branch
          %1003 = sbr.rel (%p1001) target = $region80
        $region79: #{tpu_custom_call.1} parent=43 // pred_region
          %s1005 = ssub.s32 128, 128
          %1006 = vsyncadd %s997, %s1005
          %s1007 = smul.addr %s37, 2
          %s1008 = sadd.s32 %s38, %s1007
          %s1009 = smul.addr %s1008, 128
          %s1010 = scalar_lea.hbm %s6, %s1009
          %s1012 = sshll.u32 %s1000, 4
          %s1013 = int_to_ptr.vmem [resolvable:$true] %s1012
          %1015 = dma.vmem_to_hbm [thread:$0]  %s1013, 128, %s1010, %s997
        $region80: #{tpu_custom_call.1} parent=43 // pred_fallthru
          _
      $region44: #{tpu_custom_call.1} parent=5 // pred_fallthru
        _
      %p1016 = scmp.le.s32.totalorder 2, %s27
      // Predicated region
      $region81: #{tpu_custom_call.1} parent=5 // pred_check
        %p1017 = pneg %p1016
      $region82: #{tpu_custom_call.1} parent=5 // pred_check_branch
        %1019 = sbr.rel (%p1017) target = $region84
      $region83: #{tpu_custom_call.1} parent=5 // pred_region
        %s1020 = ssub.s32 %s27, 2
        // Predicated region
        $region85: #{tpu_custom_call.1} parent=83 // pred_check
          %p1021 = pneg %p249
        $region86: #{tpu_custom_call.1} parent=83 // pred_check_branch
          %1023 = sbr.rel (%p1021) target = $region88
        $region87: #{tpu_custom_call.1} parent=83 // pred_region
          %s1024 = sand.u32 %s234, 1
          %s1025 = scalar_lea.sflag [#allocation4], %s1024
          %s1026 = sand.u32 %s234, 1
          %s1027 = smul.addr %s1026, 8
          %s1028 = scalar_lea.vmem [#allocation13], %s1027
          %1029 = dma.done %s1025, 128
        $region88: #{tpu_custom_call.1} parent=83 // pred_fallthru
          _
      $region84: #{tpu_custom_call.1} parent=5 // pred_fallthru
        _
    $region6: #{tpu_custom_call.1} parent=1 // loop_footer
      %s31 = sadd.s32 1, %s27
    $region7: #{tpu_custom_call.1} parent=1 // loop_footer_branch
      %26 = sbr.rel target = $region3
    $region8: #{tpu_custom_call.1} parent=1 // loop_exit
      _
    %1030 = vsyncpa [#allocation3], 1
    %s1031 = scalar_lea.sflag [#allocation3], 1
    %1032 = vsyncpa %s1031, 1
    %1033 = vsyncpa [#allocation6], 1
    %s1034 = scalar_lea.sflag [#allocation6], 1
    %1035 = vsyncpa %s1034, 1
    %1036 = vsyncpa [#allocation9], 1
    %s1037 = scalar_lea.sflag [#allocation9], 1
    %1038 = vsyncpa %s1037, 1
    %1039 = vsyncpa [#allocation12], 1
    %s1040 = scalar_lea.sflag [#allocation12], 1
    %1041 = vsyncpa %s1040, 1
    %1042 = vsyncpa [#allocation4], 1
    %s1043 = scalar_lea.sflag [#allocation4], 1
    %1044 = vsyncpa %s1043, 1

</llo_original>
